<compile_context>
chip_gen: v5e
topology: v5e:2x2
jax: 0.10.0
libtpu: 0.0.40
codegen_flags: <defaults>
</compile_context>

<pallas_src>
import functools

import jax
import jax.numpy as jnp
import numpy as np
from jax.experimental import pallas as pl
from jax.experimental.pallas import tpu as pltpu


def _round_up(x, m):
    return (x + m - 1) // m * m


def _conv_kernel(x_ref, w_ref, b_ref, o_ref, *patch_refs, th, wo, k, n_sw):
    # x_ref:      (1, Hp, Wp2, 2*Cin)      full padded, column-paired image (resident per batch)
    # w_ref:      (K*n_sw, 2*Cin, Cout_p)  conv weight reorganised for paired columns
    # b_ref:      (1, Cout_p)              bias (f32)
    # o_ref:      (1, TH*Wo, Cout_p)       one spatial tile of the flattened output
    # patch_refs: n_sw VMEM scratch slabs, each (TH*Wo, 2*Cin)
    t = pl.program_id(1)
    oh0 = t * th                                   # first output row of this tile
    cout_p = o_ref.shape[-1]
    acc = jnp.zeros((th * wo, cout_p), jnp.float32)

    for kh in range(k):
        # Build the patch slabs for this kernel row: output row (oh0 + r) uses input row
        # 2*(oh0 + r) + kh; the two/three kw taps live in the paired channels + a shift of
        # one pair column (handled by the sw slabs).
        for r in range(th):
            row = x_ref[0, 2 * (oh0 + r) + kh]     # (Wp2, 2*Cin)
            for sw in range(n_sw):
                patch_refs[sw][pl.ds(r * wo, wo), :] = row[sw:sw + wo, :]
        for sw in range(n_sw):
            acc = acc + jnp.dot(patch_refs[sw][...], w_ref[kh * n_sw + sw],
                                preferred_element_type=jnp.float32)

    # Bias added once per tile in f32, then a single lane-dense store.
    o_ref[0] = (acc + b_ref[...].astype(jnp.float32)).astype(o_ref.dtype)


def downsampling_forward(x_nchw, weight, bias, *, stride=2, padding=1,
                         block_out_rows=None, compute_dtype=None,
                         output_format="NCHW"):
    """Equivalent of Downsampling.forward (norm=Identity) for the stride-2 MetaFormer stem."""
    N, Cin, H, W = x_nchw.shape
    Cout, Cin_w, KH, KW = weight.shape
    assert Cin == Cin_w and KH == KW, "square kernels only"
    assert stride == 2, "kernel is specialised for the stride-2 MetaFormer downsample"
    K = KH
    Ho = (H + 2 * padding - K) // stride + 1
    Wo = (W + 2 * padding - K) // stride + 1
    n_sw = (K + 1) // 2                 # pair-column shifts per kernel row (stride 2)
    Cin2 = 2 * Cin                      # contraction dim per matmul (128-aligned for Cin=64)
    Cout_p = _round_up(Cout, 128)       # lane-dense output / weight columns

    # ---- norm: nn.Identity() in this configuration ----
    # TODO(synk): fuse downsample_norm (LayerNorm2d) here when a norm_layer is supplied.

    # ---- spatial tiling (target ~512 output pixels per tile, second-minor multiple of 8) ----
    if block_out_rows is None:
        block_out_rows = max(1, 512 // max(Wo, 1))
    th = min(block_out_rows, Ho)
    while th < Ho and (th * Wo) % 8 != 0:
        th += 1
    n_t = pl.cdiv(Ho, th)
    Ho_pad = n_t * th
    TM = th * Wo

    # ---- glue: NCHW -> NHWC, zero pad, pair adjacent columns (free reshape, no im2col) ----
    Hp = max(H + 2 * padding, 2 * (Ho_pad - 1) + K)
    Wp = max(W + 2 * padding, 2 * (Wo + n_sw - 1))
    Wp = Wp + (Wp % 2)
    x = jnp.transpose(x_nchw, (0, 2, 3, 1))                      # (N, H, W, Cin)
    x = jnp.pad(x, ((0, 0), (padding, Hp - H - padding),
                    (padding, Wp - W - padding), (0, 0)))
    x_pair = x.reshape(N, Hp, Wp // 2, Cin2)                     # cols (2q, 2q+1) paired
    Wp2 = Wp // 2

    # ---- weight / bias reorg (tiny, done once) ----
    wt = jnp.transpose(weight, (2, 3, 1, 0))                     # (K, K, Cin, Cout)
    wt = jnp.pad(wt, ((0, 0), (0, 2 * n_sw - K), (0, 0), (0, Cout_p - Cout)))
    w_kernel = wt.reshape(K, n_sw, 2, Cin, Cout_p).reshape(K * n_sw, Cin2, Cout_p)
    b_row = jnp.pad(bias, (0, Cout_p - Cout)).reshape(1, Cout_p).astype(jnp.float32)

    if compute_dtype is not None:
        x_pair = x_pair.astype(compute_dtype)
        w_kernel = w_kernel.astype(compute_dtype)

    kernel = functools.partial(_conv_kernel, th=th, wo=Wo, k=K, n_sw=n_sw)

    flops = 2 * N * Ho * Wo * K * K * Cin * Cout
    out_itemsize = jnp.dtype(x_nchw.dtype).itemsize
    bytes_accessed = (x_pair.size * x_pair.dtype.itemsize
                      + w_kernel.size * w_kernel.dtype.itemsize
                      + N * Ho_pad * Wo * Cout_p * out_itemsize)

    out_flat = pl.pallas_call(
        kernel,
        out_shape=jax.ShapeDtypeStruct((N, Ho_pad * Wo, Cout_p), x_nchw.dtype),
        grid_spec=pltpu.PrefetchScalarGridSpec(
            num_scalar_prefetch=0,
            grid=(N, n_t),
            in_specs=[
                pl.BlockSpec((1, Hp, Wp2, Cin2), lambda n, t: (n, 0, 0, 0)),
                pl.BlockSpec((K * n_sw, Cin2, Cout_p), lambda n, t: (0, 0, 0)),
                pl.BlockSpec((1, Cout_p), lambda n, t: (0, 0)),
            ],
            out_specs=pl.BlockSpec((1, TM, Cout_p), lambda n, t: (n, t, 0)),
            scratch_shapes=[pltpu.VMEM((TM, Cin2), x_pair.dtype) for _ in range(n_sw)],
        ),
        compiler_params=pltpu.CompilerParams(
            dimension_semantics=("parallel", "parallel"),
            vmem_limit_bytes=32 * 1024 * 1024,
        ),
        cost_estimate=pl.CostEstimate(flops=flops, transcendentals=0,
                                      bytes_accessed=bytes_accessed),
    )(x_pair, w_kernel, b_row)

    out = out_flat.reshape(N, Ho_pad, Wo, Cout_p)[:, :Ho, :, :Cout]
    if output_format == "NHWC":
        return out
    return jnp.transpose(out, (0, 3, 1, 2))                      # back to NCHW at module boundary


if __name__ == "__main__":
    # Typical metaformer stem/downsampling config at small test shapes:
    N, Cin, H, W = 2, 4, 16, 16
    Cout, K, stride, padding = 8, 3, 2, 1

    key = jax.random.PRNGKey(0)
    kx, kw, kb = jax.random.split(key, 3)

    x = jax.random.normal(kx, (N, Cin, H, W), dtype=jnp.float32)
    bound = 1.0 / float(np.sqrt(Cin * K * K))
    weight = jax.random.uniform(kw, (Cout, Cin, K, K), jnp.float32, -bound, bound)
    bias = jax.random.uniform(kb, (Cout,), jnp.float32, -bound, bound)

    # f32 compute path; block_out_rows=4 exercises the spatial grid axis (grid = (2, 2)).
    y = downsampling_forward(x, weight, bias, stride=stride, padding=padding,
                             block_out_rows=4)
    y = jax.block_until_ready(y)

    # Reference: XLA conv with nn.Conv2d semantics.
    y_ref = jax.lax.conv_general_dilated(
        x, weight,
        window_strides=(stride, stride),
        padding=((padding, padding), (padding, padding)),
        dimension_numbers=("NCHW", "OIHW", "NCHW"),
    ) + bias.reshape(1, -1, 1, 1)

    Ho = (H + 2 * padding - K) // stride + 1
    Wo = (W + 2 * padding - K) // stride + 1
    assert y.shape == (N, Cout, Ho, Wo)
    np.testing.assert_allclose(np.asarray(y), np.asarray(y_ref), atol=1e-4, rtol=1e-4)

    # bf16 operands (v6e/v7x MXU rate), f32 accumulation: looser tolerance.
    y_bf16 = downsampling_forward(x, weight, bias, stride=stride, padding=padding,
                                  block_out_rows=4, compute_dtype=jnp.bfloat16)
    y_bf16 = jax.block_until_ready(y_bf16)
    np.testing.assert_allclose(np.asarray(y_bf16), np.asarray(y_ref), atol=5e-2, rtol=5e-2)

    print("KERNEL_OK")
</pallas_src>

<mosaic_0001>
module attributes {stable_mosaic.version = 11 : i64} {
  func.func @_conv_kernel(%arg0: i32, %arg1: i32, %arg2: memref<1x18x9x8xf32, #tpu.memory_space<vmem>>, %arg3: memref<6x8x128xf32, #tpu.memory_space<vmem>>, %arg4: memref<1x128xf32, #tpu.memory_space<vmem>>, %arg5: memref<1x32x128xf32, #tpu.memory_space<vmem>>, %arg6: memref<32x8xf32, #tpu.memory_space<vmem>>, %arg7: memref<32x8xf32, #tpu.memory_space<vmem>>) attributes {dimension_semantics = [#tpu.dimension_semantics<parallel>, #tpu.dimension_semantics<parallel>], iteration_bounds = array<i64: 2, 2>, scalar_prefetch = 0 : i64, scratch_operands = 2 : i64, tpu.core_type = #tpu.core_type<tc>, window_params = [{transform_indices = @transform_0, window_bounds = array<i64: 1, 18, 9, 8>}, {pipeline_mode = #tpu.pipeline_mode<synchronous>, transform_indices = @transform_1, window_bounds = array<i64: 6, 8, 128>}, {pipeline_mode = #tpu.pipeline_mode<synchronous>, transform_indices = @transform_2, window_bounds = array<i64: 1, 128>}, {transform_indices = @transform_3, window_bounds = array<i64: 1, 32, 128>}]} {
    %c4_i32 = arith.constant 4 : i32
    %0 = arith.muli %arg1, %c4_i32 : i32
    %cst = arith.constant 0.000000e+00 : f32
    %1 = vector.broadcast %cst : f32 to vector<32x128xf32>
    %c0_i32 = arith.constant 0 : i32
    %2 = arith.addi %0, %c0_i32 : i32
    %c2_i32 = arith.constant 2 : i32
    %3 = arith.muli %c2_i32, %2 : i32
    %c0_i32_0 = arith.constant 0 : i32
    %4 = arith.addi %3, %c0_i32_0 : i32
    %c0 = arith.constant 0 : index
    %5 = arith.index_cast %4 : i32 to index
    %c0_1 = arith.constant 0 : index
    %c0_2 = arith.constant 0 : index
    %6 = vector.load %arg2[%c0, %5, %c0_1, %c0_2] : memref<1x18x9x8xf32, #tpu.memory_space<vmem>>, vector<1x1x9x8xf32>
    %7 = vector.shape_cast %6 : vector<1x1x9x8xf32> to vector<9x8xf32>
    %8 = vector.extract_strided_slice %7 {offsets = [0, 0], sizes = [8, 8], strides = [1, 1]} : vector<9x8xf32> to vector<8x8xf32>
    %c0_3 = arith.constant 0 : index
    %c0_4 = arith.constant 0 : index
    %9 = vector.load %arg6[%c0_3, %c0_4] : memref<32x8xf32, #tpu.memory_space<vmem>>, vector<8x8xf32>
    tpu.vector_store %arg6[%c0_3, %c0_4], %8 {strides = array<i32>} : memref<32x8xf32, #tpu.memory_space<vmem>>, vector<8x8xf32>,
    %10 = vector.extract_strided_slice %7 {offsets = [1, 0], sizes = [8, 8], strides = [1, 1]} : vector<9x8xf32> to vector<8x8xf32>
    %c0_5 = arith.constant 0 : index
    %c0_6 = arith.constant 0 : index
    %11 = vector.load %arg7[%c0_5, %c0_6] : memref<32x8xf32, #tpu.memory_space<vmem>>, vector<8x8xf32>
    tpu.vector_store %arg7[%c0_5, %c0_6], %10 {strides = array<i32>} : memref<32x8xf32, #tpu.memory_space<vmem>>, vector<8x8xf32>,
    %c1_i32 = arith.constant 1 : i32
    %12 = arith.addi %0, %c1_i32 : i32
    %c2_i32_7 = arith.constant 2 : i32
    %13 = arith.muli %c2_i32_7, %12 : i32
    %c0_i32_8 = arith.constant 0 : i32
    %14 = arith.addi %13, %c0_i32_8 : i32
    %c0_9 = arith.constant 0 : index
    %15 = arith.index_cast %14 : i32 to index
    %c0_10 = arith.constant 0 : index
    %c0_11 = arith.constant 0 : index
    %16 = vector.load %arg2[%c0_9, %15, %c0_10, %c0_11] : memref<1x18x9x8xf32, #tpu.memory_space<vmem>>, vector<1x1x9x8xf32>
    %17 = vector.shape_cast %16 : vector<1x1x9x8xf32> to vector<9x8xf32>
    %18 = vector.extract_strided_slice %17 {offsets = [0, 0], sizes = [8, 8], strides = [1, 1]} : vector<9x8xf32> to vector<8x8xf32>
    %c8 = arith.constant 8 : index
    %c0_12 = arith.constant 0 : index
    %19 = vector.load %arg6[%c8, %c0_12] : memref<32x8xf32, #tpu.memory_space<vmem>>, vector<8x8xf32>
    tpu.vector_store %arg6[%c8, %c0_12], %18 {strides = array<i32>} : memref<32x8xf32, #tpu.memory_space<vmem>>, vector<8x8xf32>,
    %20 = vector.extract_strided_slice %17 {offsets = [1, 0], sizes = [8, 8], strides = [1, 1]} : vector<9x8xf32> to vector<8x8xf32>
    %c8_13 = arith.constant 8 : index
    %c0_14 = arith.constant 0 : index
    %21 = vector.load %arg7[%c8_13, %c0_14] : memref<32x8xf32, #tpu.memory_space<vmem>>, vector<8x8xf32>
    tpu.vector_store %arg7[%c8_13, %c0_14], %20 {strides = array<i32>} : memref<32x8xf32, #tpu.memory_space<vmem>>, vector<8x8xf32>,
    %c2_i32_15 = arith.constant 2 : i32
    %22 = arith.addi %0, %c2_i32_15 : i32
    %c2_i32_16 = arith.constant 2 : i32
    %23 = arith.muli %c2_i32_16, %22 : i32
    %c0_i32_17 = arith.constant 0 : i32
    %24 = arith.addi %23, %c0_i32_17 : i32
    %c0_18 = arith.constant 0 : index
    %25 = arith.index_cast %24 : i32 to index
    %c0_19 = arith.constant 0 : index
    %c0_20 = arith.constant 0 : index
    %26 = vector.load %arg2[%c0_18, %25, %c0_19, %c0_20] : memref<1x18x9x8xf32, #tpu.memory_space<vmem>>, vector<1x1x9x8xf32>
    %27 = vector.shape_cast %26 : vector<1x1x9x8xf32> to vector<9x8xf32>
    %28 = vector.extract_strided_slice %27 {offsets = [0, 0], sizes = [8, 8], strides = [1, 1]} : vector<9x8xf32> to vector<8x8xf32>
    %c16 = arith.constant 16 : index
    %c0_21 = arith.constant 0 : index
    %29 = vector.load %arg6[%c16, %c0_21] : memref<32x8xf32, #tpu.memory_space<vmem>>, vector<8x8xf32>
    tpu.vector_store %arg6[%c16, %c0_21], %28 {strides = array<i32>} : memref<32x8xf32, #tpu.memory_space<vmem>>, vector<8x8xf32>,
    %30 = vector.extract_strided_slice %27 {offsets = [1, 0], sizes = [8, 8], strides = [1, 1]} : vector<9x8xf32> to vector<8x8xf32>
    %c16_22 = arith.constant 16 : index
    %c0_23 = arith.constant 0 : index
    %31 = vector.load %arg7[%c16_22, %c0_23] : memref<32x8xf32, #tpu.memory_space<vmem>>, vector<8x8xf32>
    tpu.vector_store %arg7[%c16_22, %c0_23], %30 {strides = array<i32>} : memref<32x8xf32, #tpu.memory_space<vmem>>, vector<8x8xf32>,
    %c3_i32 = arith.constant 3 : i32
    %32 = arith.addi %0, %c3_i32 : i32
    %c2_i32_24 = arith.constant 2 : i32
    %33 = arith.muli %c2_i32_24, %32 : i32
    %c0_i32_25 = arith.constant 0 : i32
    %34 = arith.addi %33, %c0_i32_25 : i32
    %c0_26 = arith.constant 0 : index
    %35 = arith.index_cast %34 : i32 to index
    %c0_27 = arith.constant 0 : index
    %c0_28 = arith.constant 0 : index
    %36 = vector.load %arg2[%c0_26, %35, %c0_27, %c0_28] : memref<1x18x9x8xf32, #tpu.memory_space<vmem>>, vector<1x1x9x8xf32>
    %37 = vector.shape_cast %36 : vector<1x1x9x8xf32> to vector<9x8xf32>
    %38 = vector.extract_strided_slice %37 {offsets = [0, 0], sizes = [8, 8], strides = [1, 1]} : vector<9x8xf32> to vector<8x8xf32>
    %c24 = arith.constant 24 : index
    %c0_29 = arith.constant 0 : index
    %39 = vector.load %arg6[%c24, %c0_29] : memref<32x8xf32, #tpu.memory_space<vmem>>, vector<8x8xf32>
    tpu.vector_store %arg6[%c24, %c0_29], %38 {strides = array<i32>} : memref<32x8xf32, #tpu.memory_space<vmem>>, vector<8x8xf32>,
    %40 = vector.extract_strided_slice %37 {offsets = [1, 0], sizes = [8, 8], strides = [1, 1]} : vector<9x8xf32> to vector<8x8xf32>
    %c24_30 = arith.constant 24 : index
    %c0_31 = arith.constant 0 : index
    %41 = vector.load %arg7[%c24_30, %c0_31] : memref<32x8xf32, #tpu.memory_space<vmem>>, vector<8x8xf32>
    tpu.vector_store %arg7[%c24_30, %c0_31], %40 {strides = array<i32>} : memref<32x8xf32, #tpu.memory_space<vmem>>, vector<8x8xf32>,
    %c0_32 = arith.constant 0 : index
    %c0_33 = arith.constant 0 : index
    %42 = vector.load %arg6[%c0_32, %c0_33] : memref<32x8xf32, #tpu.memory_space<vmem>>, vector<32x8xf32>
    %c0_34 = arith.constant 0 : index
    %c0_35 = arith.constant 0 : index
    %c0_36 = arith.constant 0 : index
    %43 = vector.load %arg3[%c0_34, %c0_35, %c0_36] : memref<6x8x128xf32, #tpu.memory_space<vmem>>, vector<1x8x128xf32>
    %44 = vector.shape_cast %43 : vector<1x8x128xf32> to vector<8x128xf32>
    %cst_37 = arith.constant dense<0.000000e+00> : vector<32x128xf32>
    %45 = tpu.matmul %42, %44, %cst_37 {dimension_numbers = #tpu.dot_dimension_numbers<[1], [0], [0], [1], [0, 0, 1, 1], [], []>} : vector<32x8xf32>, vector<8x128xf32>, vector<32x128xf32> -> vector<32x128xf32>
    %46 = arith.addf %1, %45 : vector<32x128xf32>
    %c0_38 = arith.constant 0 : index
    %c0_39 = arith.constant 0 : index
    %47 = vector.load %arg7[%c0_38, %c0_39] : memref<32x8xf32, #tpu.memory_space<vmem>>, vector<32x8xf32>
    %c1 = arith.constant 1 : index
    %c0_40 = arith.constant 0 : index
    %c0_41 = arith.constant 0 : index
    %48 = vector.load %arg3[%c1, %c0_40, %c0_41] : memref<6x8x128xf32, #tpu.memory_space<vmem>>, vector<1x8x128xf32>
    %49 = vector.shape_cast %48 : vector<1x8x128xf32> to vector<8x128xf32>
    %cst_42 = arith.constant dense<0.000000e+00> : vector<32x128xf32>
    %50 = tpu.matmul %47, %49, %cst_42 {dimension_numbers = #tpu.dot_dimension_numbers<[1], [0], [0], [1], [0, 0, 1, 1], [], []>} : vector<32x8xf32>, vector<8x128xf32>, vector<32x128xf32> -> vector<32x128xf32>
    %51 = arith.addf %46, %50 : vector<32x128xf32>
    %c0_i32_43 = arith.constant 0 : i32
    %52 = arith.addi %0, %c0_i32_43 : i32
    %c2_i32_44 = arith.constant 2 : i32
    %53 = arith.muli %c2_i32_44, %52 : i32
    %c1_i32_45 = arith.constant 1 : i32
    %54 = arith.addi %53, %c1_i32_45 : i32
    %c0_46 = arith.constant 0 : index
    %55 = arith.index_cast %54 : i32 to index
    %c0_47 = arith.constant 0 : index
    %c0_48 = arith.constant 0 : index
    %56 = vector.load %arg2[%c0_46, %55, %c0_47, %c0_48] : memref<1x18x9x8xf32, #tpu.memory_space<vmem>>, vector<1x1x9x8xf32>
    %57 = vector.shape_cast %56 : vector<1x1x9x8xf32> to vector<9x8xf32>
    %58 = vector.extract_strided_slice %57 {offsets = [0, 0], sizes = [8, 8], strides = [1, 1]} : vector<9x8xf32> to vector<8x8xf32>
    %c0_49 = arith.constant 0 : index
    %c0_50 = arith.constant 0 : index
    %59 = vector.load %arg6[%c0_49, %c0_50] : memref<32x8xf32, #tpu.memory_space<vmem>>, vector<8x8xf32>
    tpu.vector_store %arg6[%c0_49, %c0_50], %58 {strides = array<i32>} : memref<32x8xf32, #tpu.memory_space<vmem>>, vector<8x8xf32>,
    %60 = vector.extract_strided_slice %57 {offsets = [1, 0], sizes = [8, 8], strides = [1, 1]} : vector<9x8xf32> to vector<8x8xf32>
    %c0_51 = arith.constant 0 : index
    %c0_52 = arith.constant 0 : index
    %61 = vector.load %arg7[%c0_51, %c0_52] : memref<32x8xf32, #tpu.memory_space<vmem>>, vector<8x8xf32>
    tpu.vector_store %arg7[%c0_51, %c0_52], %60 {strides = array<i32>} : memref<32x8xf32, #tpu.memory_space<vmem>>, vector<8x8xf32>,
    %c1_i32_53 = arith.constant 1 : i32
    %62 = arith.addi %0, %c1_i32_53 : i32
    %c2_i32_54 = arith.constant 2 : i32
    %63 = arith.muli %c2_i32_54, %62 : i32
    %c1_i32_55 = arith.constant 1 : i32
    %64 = arith.addi %63, %c1_i32_55 : i32
    %c0_56 = arith.constant 0 : index
    %65 = arith.index_cast %64 : i32 to index
    %c0_57 = arith.constant 0 : index
    %c0_58 = arith.constant 0 : index
    %66 = vector.load %arg2[%c0_56, %65, %c0_57, %c0_58] : memref<1x18x9x8xf32, #tpu.memory_space<vmem>>, vector<1x1x9x8xf32>
    %67 = vector.shape_cast %66 : vector<1x1x9x8xf32> to vector<9x8xf32>
    %68 = vector.extract_strided_slice %67 {offsets = [0, 0], sizes = [8, 8], strides = [1, 1]} : vector<9x8xf32> to vector<8x8xf32>
    %c8_59 = arith.constant 8 : index
    %c0_60 = arith.constant 0 : index
    %69 = vector.load %arg6[%c8_59, %c0_60] : memref<32x8xf32, #tpu.memory_space<vmem>>, vector<8x8xf32>
    tpu.vector_store %arg6[%c8_59, %c0_60], %68 {strides = array<i32>} : memref<32x8xf32, #tpu.memory_space<vmem>>, vector<8x8xf32>,
    %70 = vector.extract_strided_slice %67 {offsets = [1, 0], sizes = [8, 8], strides = [1, 1]} : vector<9x8xf32> to vector<8x8xf32>
    %c8_61 = arith.constant 8 : index
    %c0_62 = arith.constant 0 : index
    %71 = vector.load %arg7[%c8_61, %c0_62] : memref<32x8xf32, #tpu.memory_space<vmem>>, vector<8x8xf32>
    tpu.vector_store %arg7[%c8_61, %c0_62], %70 {strides = array<i32>} : memref<32x8xf32, #tpu.memory_space<vmem>>, vector<8x8xf32>,
    %c2_i32_63 = arith.constant 2 : i32
    %72 = arith.addi %0, %c2_i32_63 : i32
    %c2_i32_64 = arith.constant 2 : i32
    %73 = arith.muli %c2_i32_64, %72 : i32
    %c1_i32_65 = arith.constant 1 : i32
    %74 = arith.addi %73, %c1_i32_65 : i32
    %c0_66 = arith.constant 0 : index
    %75 = arith.index_cast %74 : i32 to index
    %c0_67 = arith.constant 0 : index
    %c0_68 = arith.constant 0 : index
    %76 = vector.load %arg2[%c0_66, %75, %c0_67, %c0_68] : memref<1x18x9x8xf32, #tpu.memory_space<vmem>>, vector<1x1x9x8xf32>
    %77 = vector.shape_cast %76 : vector<1x1x9x8xf32> to vector<9x8xf32>
    %78 = vector.extract_strided_slice %77 {offsets = [0, 0], sizes = [8, 8], strides = [1, 1]} : vector<9x8xf32> to vector<8x8xf32>
    %c16_69 = arith.constant 16 : index
    %c0_70 = arith.constant 0 : index
    %79 = vector.load %arg6[%c16_69, %c0_70] : memref<32x8xf32, #tpu.memory_space<vmem>>, vector<8x8xf32>
    tpu.vector_store %arg6[%c16_69, %c0_70], %78 {strides = array<i32>} : memref<32x8xf32, #tpu.memory_space<vmem>>, vector<8x8xf32>,
    %80 = vector.extract_strided_slice %77 {offsets = [1, 0], sizes = [8, 8], strides = [1, 1]} : vector<9x8xf32> to vector<8x8xf32>
    %c16_71 = arith.constant 16 : index
    %c0_72 = arith.constant 0 : index
    %81 = vector.load %arg7[%c16_71, %c0_72] : memref<32x8xf32, #tpu.memory_space<vmem>>, vector<8x8xf32>
    tpu.vector_store %arg7[%c16_71, %c0_72], %80 {strides = array<i32>} : memref<32x8xf32, #tpu.memory_space<vmem>>, vector<8x8xf32>,
    %c3_i32_73 = arith.constant 3 : i32
    %82 = arith.addi %0, %c3_i32_73 : i32
    %c2_i32_74 = arith.constant 2 : i32
    %83 = arith.muli %c2_i32_74, %82 : i32
    %c1_i32_75 = arith.constant 1 : i32
    %84 = arith.addi %83, %c1_i32_75 : i32
    %c0_76 = arith.constant 0 : index
    %85 = arith.index_cast %84 : i32 to index
    %c0_77 = arith.constant 0 : index
    %c0_78 = arith.constant 0 : index
    %86 = vector.load %arg2[%c0_76, %85, %c0_77, %c0_78] : memref<1x18x9x8xf32, #tpu.memory_space<vmem>>, vector<1x1x9x8xf32>
    %87 = vector.shape_cast %86 : vector<1x1x9x8xf32> to vector<9x8xf32>
    %88 = vector.extract_strided_slice %87 {offsets = [0, 0], sizes = [8, 8], strides = [1, 1]} : vector<9x8xf32> to vector<8x8xf32>
    %c24_79 = arith.constant 24 : index
    %c0_80 = arith.constant 0 : index
    %89 = vector.load %arg6[%c24_79, %c0_80] : memref<32x8xf32, #tpu.memory_space<vmem>>, vector<8x8xf32>
    tpu.vector_store %arg6[%c24_79, %c0_80], %88 {strides = array<i32>} : memref<32x8xf32, #tpu.memory_space<vmem>>, vector<8x8xf32>,
    %90 = vector.extract_strided_slice %87 {offsets = [1, 0], sizes = [8, 8], strides = [1, 1]} : vector<9x8xf32> to vector<8x8xf32>
    %c24_81 = arith.constant 24 : index
    %c0_82 = arith.constant 0 : index
    %91 = vector.load %arg7[%c24_81, %c0_82] : memref<32x8xf32, #tpu.memory_space<vmem>>, vector<8x8xf32>
    tpu.vector_store %arg7[%c24_81, %c0_82], %90 {strides = array<i32>} : memref<32x8xf32, #tpu.memory_space<vmem>>, vector<8x8xf32>,
    %c0_83 = arith.constant 0 : index
    %c0_84 = arith.constant 0 : index
    %92 = vector.load %arg6[%c0_83, %c0_84] : memref<32x8xf32, #tpu.memory_space<vmem>>, vector<32x8xf32>
    %c2 = arith.constant 2 : index
    %c0_85 = arith.constant 0 : index
    %c0_86 = arith.constant 0 : index
    %93 = vector.load %arg3[%c2, %c0_85, %c0_86] : memref<6x8x128xf32, #tpu.memory_space<vmem>>, vector<1x8x128xf32>
    %94 = vector.shape_cast %93 : vector<1x8x128xf32> to vector<8x128xf32>
    %cst_87 = arith.constant dense<0.000000e+00> : vector<32x128xf32>
    %95 = tpu.matmul %92, %94, %cst_87 {dimension_numbers = #tpu.dot_dimension_numbers<[1], [0], [0], [1], [0, 0, 1, 1], [], []>} : vector<32x8xf32>, vector<8x128xf32>, vector<32x128xf32> -> vector<32x128xf32>
    %96 = arith.addf %51, %95 : vector<32x128xf32>
    %c0_88 = arith.constant 0 : index
    %c0_89 = arith.constant 0 : index
    %97 = vector.load %arg7[%c0_88, %c0_89] : memref<32x8xf32, #tpu.memory_space<vmem>>, vector<32x8xf32>
    %c3 = arith.constant 3 : index
    %c0_90 = arith.constant 0 : index
    %c0_91 = arith.constant 0 : index
    %98 = vector.load %arg3[%c3, %c0_90, %c0_91] : memref<6x8x128xf32, #tpu.memory_space<vmem>>, vector<1x8x128xf32>
    %99 = vector.shape_cast %98 : vector<1x8x128xf32> to vector<8x128xf32>
    %cst_92 = arith.constant dense<0.000000e+00> : vector<32x128xf32>
    %100 = tpu.matmul %97, %99, %cst_92 {dimension_numbers = #tpu.dot_dimension_numbers<[1], [0], [0], [1], [0, 0, 1, 1], [], []>} : vector<32x8xf32>, vector<8x128xf32>, vector<32x128xf32> -> vector<32x128xf32>
    %101 = arith.addf %96, %100 : vector<32x128xf32>
    %c0_i32_93 = arith.constant 0 : i32
    %102 = arith.addi %0, %c0_i32_93 : i32
    %c2_i32_94 = arith.constant 2 : i32
    %103 = arith.muli %c2_i32_94, %102 : i32
    %c2_i32_95 = arith.constant 2 : i32
    %104 = arith.addi %103, %c2_i32_95 : i32
    %c0_96 = arith.constant 0 : index
    %105 = arith.index_cast %104 : i32 to index
    %c0_97 = arith.constant 0 : index
    %c0_98 = arith.constant 0 : index
    %106 = vector.load %arg2[%c0_96, %105, %c0_97, %c0_98] : memref<1x18x9x8xf32, #tpu.memory_space<vmem>>, vector<1x1x9x8xf32>
    %107 = vector.shape_cast %106 : vector<1x1x9x8xf32> to vector<9x8xf32>
    %108 = vector.extract_strided_slice %107 {offsets = [0, 0], sizes = [8, 8], strides = [1, 1]} : vector<9x8xf32> to vector<8x8xf32>
    %c0_99 = arith.constant 0 : index
    %c0_100 = arith.constant 0 : index
    %109 = vector.load %arg6[%c0_99, %c0_100] : memref<32x8xf32, #tpu.memory_space<vmem>>, vector<8x8xf32>
    tpu.vector_store %arg6[%c0_99, %c0_100], %108 {strides = array<i32>} : memref<32x8xf32, #tpu.memory_space<vmem>>, vector<8x8xf32>,
    %110 = vector.extract_strided_slice %107 {offsets = [1, 0], sizes = [8, 8], strides = [1, 1]} : vector<9x8xf32> to vector<8x8xf32>
    %c0_101 = arith.constant 0 : index
    %c0_102 = arith.constant 0 : index
    %111 = vector.load %arg7[%c0_101, %c0_102] : memref<32x8xf32, #tpu.memory_space<vmem>>, vector<8x8xf32>
    tpu.vector_store %arg7[%c0_101, %c0_102], %110 {strides = array<i32>} : memref<32x8xf32, #tpu.memory_space<vmem>>, vector<8x8xf32>,
    %c1_i32_103 = arith.constant 1 : i32
    %112 = arith.addi %0, %c1_i32_103 : i32
    %c2_i32_104 = arith.constant 2 : i32
    %113 = arith.muli %c2_i32_104, %112 : i32
    %c2_i32_105 = arith.constant 2 : i32
    %114 = arith.addi %113, %c2_i32_105 : i32
    %c0_106 = arith.constant 0 : index
    %115 = arith.index_cast %114 : i32 to index
    %c0_107 = arith.constant 0 : index
    %c0_108 = arith.constant 0 : index
    %116 = vector.load %arg2[%c0_106, %115, %c0_107, %c0_108] : memref<1x18x9x8xf32, #tpu.memory_space<vmem>>, vector<1x1x9x8xf32>
    %117 = vector.shape_cast %116 : vector<1x1x9x8xf32> to vector<9x8xf32>
    %118 = vector.extract_strided_slice %117 {offsets = [0, 0], sizes = [8, 8], strides = [1, 1]} : vector<9x8xf32> to vector<8x8xf32>
    %c8_109 = arith.constant 8 : index
    %c0_110 = arith.constant 0 : index
    %119 = vector.load %arg6[%c8_109, %c0_110] : memref<32x8xf32, #tpu.memory_space<vmem>>, vector<8x8xf32>
    tpu.vector_store %arg6[%c8_109, %c0_110], %118 {strides = array<i32>} : memref<32x8xf32, #tpu.memory_space<vmem>>, vector<8x8xf32>,
    %120 = vector.extract_strided_slice %117 {offsets = [1, 0], sizes = [8, 8], strides = [1, 1]} : vector<9x8xf32> to vector<8x8xf32>
    %c8_111 = arith.constant 8 : index
    %c0_112 = arith.constant 0 : index
    %121 = vector.load %arg7[%c8_111, %c0_112] : memref<32x8xf32, #tpu.memory_space<vmem>>, vector<8x8xf32>
    tpu.vector_store %arg7[%c8_111, %c0_112], %120 {strides = array<i32>} : memref<32x8xf32, #tpu.memory_space<vmem>>, vector<8x8xf32>,
    %c2_i32_113 = arith.constant 2 : i32
    %122 = arith.addi %0, %c2_i32_113 : i32
    %c2_i32_114 = arith.constant 2 : i32
    %123 = arith.muli %c2_i32_114, %122 : i32
    %c2_i32_115 = arith.constant 2 : i32
    %124 = arith.addi %123, %c2_i32_115 : i32
    %c0_116 = arith.constant 0 : index
    %125 = arith.index_cast %124 : i32 to index
    %c0_117 = arith.constant 0 : index
    %c0_118 = arith.constant 0 : index
    %126 = vector.load %arg2[%c0_116, %125, %c0_117, %c0_118] : memref<1x18x9x8xf32, #tpu.memory_space<vmem>>, vector<1x1x9x8xf32>
    %127 = vector.shape_cast %126 : vector<1x1x9x8xf32> to vector<9x8xf32>
    %128 = vector.extract_strided_slice %127 {offsets = [0, 0], sizes = [8, 8], strides = [1, 1]} : vector<9x8xf32> to vector<8x8xf32>
    %c16_119 = arith.constant 16 : index
    %c0_120 = arith.constant 0 : index
    %129 = vector.load %arg6[%c16_119, %c0_120] : memref<32x8xf32, #tpu.memory_space<vmem>>, vector<8x8xf32>
    tpu.vector_store %arg6[%c16_119, %c0_120], %128 {strides = array<i32>} : memref<32x8xf32, #tpu.memory_space<vmem>>, vector<8x8xf32>,
    %130 = vector.extract_strided_slice %127 {offsets = [1, 0], sizes = [8, 8], strides = [1, 1]} : vector<9x8xf32> to vector<8x8xf32>
    %c16_121 = arith.constant 16 : index
    %c0_122 = arith.constant 0 : index
    %131 = vector.load %arg7[%c16_121, %c0_122] : memref<32x8xf32, #tpu.memory_space<vmem>>, vector<8x8xf32>
    tpu.vector_store %arg7[%c16_121, %c0_122], %130 {strides = array<i32>} : memref<32x8xf32, #tpu.memory_space<vmem>>, vector<8x8xf32>,
    %c3_i32_123 = arith.constant 3 : i32
    %132 = arith.addi %0, %c3_i32_123 : i32
    %c2_i32_124 = arith.constant 2 : i32
    %133 = arith.muli %c2_i32_124, %132 : i32
    %c2_i32_125 = arith.constant 2 : i32
    %134 = arith.addi %133, %c2_i32_125 : i32
    %c0_126 = arith.constant 0 : index
    %135 = arith.index_cast %134 : i32 to index
    %c0_127 = arith.constant 0 : index
    %c0_128 = arith.constant 0 : index
    %136 = vector.load %arg2[%c0_126, %135, %c0_127, %c0_128] : memref<1x18x9x8xf32, #tpu.memory_space<vmem>>, vector<1x1x9x8xf32>
    %137 = vector.shape_cast %136 : vector<1x1x9x8xf32> to vector<9x8xf32>
    %138 = vector.extract_strided_slice %137 {offsets = [0, 0], sizes = [8, 8], strides = [1, 1]} : vector<9x8xf32> to vector<8x8xf32>
    %c24_129 = arith.constant 24 : index
    %c0_130 = arith.constant 0 : index
    %139 = vector.load %arg6[%c24_129, %c0_130] : memref<32x8xf32, #tpu.memory_space<vmem>>, vector<8x8xf32>
    tpu.vector_store %arg6[%c24_129, %c0_130], %138 {strides = array<i32>} : memref<32x8xf32, #tpu.memory_space<vmem>>, vector<8x8xf32>,
    %140 = vector.extract_strided_slice %137 {offsets = [1, 0], sizes = [8, 8], strides = [1, 1]} : vector<9x8xf32> to vector<8x8xf32>
    %c24_131 = arith.constant 24 : index
    %c0_132 = arith.constant 0 : index
    %141 = vector.load %arg7[%c24_131, %c0_132] : memref<32x8xf32, #tpu.memory_space<vmem>>, vector<8x8xf32>
    tpu.vector_store %arg7[%c24_131, %c0_132], %140 {strides = array<i32>} : memref<32x8xf32, #tpu.memory_space<vmem>>, vector<8x8xf32>,
    %c0_133 = arith.constant 0 : index
    %c0_134 = arith.constant 0 : index
    %142 = vector.load %arg6[%c0_133, %c0_134] : memref<32x8xf32, #tpu.memory_space<vmem>>, vector<32x8xf32>
    %c4 = arith.constant 4 : index
    %c0_135 = arith.constant 0 : index
    %c0_136 = arith.constant 0 : index
    %143 = vector.load %arg3[%c4, %c0_135, %c0_136] : memref<6x8x128xf32, #tpu.memory_space<vmem>>, vector<1x8x128xf32>
    %144 = vector.shape_cast %143 : vector<1x8x128xf32> to vector<8x128xf32>
    %cst_137 = arith.constant dense<0.000000e+00> : vector<32x128xf32>
    %145 = tpu.matmul %142, %144, %cst_137 {dimension_numbers = #tpu.dot_dimension_numbers<[1], [0], [0], [1], [0, 0, 1, 1], [], []>} : vector<32x8xf32>, vector<8x128xf32>, vector<32x128xf32> -> vector<32x128xf32>
    %146 = arith.addf %101, %145 : vector<32x128xf32>
    %c0_138 = arith.constant 0 : index
    %c0_139 = arith.constant 0 : index
    %147 = vector.load %arg7[%c0_138, %c0_139] : memref<32x8xf32, #tpu.memory_space<vmem>>, vector<32x8xf32>
    %c5 = arith.constant 5 : index
    %c0_140 = arith.constant 0 : index
    %c0_141 = arith.constant 0 : index
    %148 = vector.load %arg3[%c5, %c0_140, %c0_141] : memref<6x8x128xf32, #tpu.memory_space<vmem>>, vector<1x8x128xf32>
    %149 = vector.shape_cast %148 : vector<1x8x128xf32> to vector<8x128xf32>
    %cst_142 = arith.constant dense<0.000000e+00> : vector<32x128xf32>
    %150 = tpu.matmul %147, %149, %cst_142 {dimension_numbers = #tpu.dot_dimension_numbers<[1], [0], [0], [1], [0, 0, 1, 1], [], []>} : vector<32x8xf32>, vector<8x128xf32>, vector<32x128xf32> -> vector<32x128xf32>
    %151 = arith.addf %146, %150 : vector<32x128xf32>
    %c0_143 = arith.constant 0 : index
    %c0_144 = arith.constant 0 : index
    %152 = vector.load %arg4[%c0_143, %c0_144] : memref<1x128xf32, #tpu.memory_space<vmem>>, vector<1x128xf32>
    %153 = vector.broadcast %152 : vector<1x128xf32> to vector<32x128xf32>
    %154 = arith.addf %151, %153 : vector<32x128xf32>
    %c0_145 = arith.constant 0 : index
    %c0_146 = arith.constant 0 : index
    %c0_147 = arith.constant 0 : index
    %155 = vector.load %arg5[%c0_145, %c0_146, %c0_147] : memref<1x32x128xf32, #tpu.memory_space<vmem>>, vector<1x32x128xf32>
    %156 = vector.shape_cast %155 : vector<1x32x128xf32> to vector<32x128xf32>
    %157 = vector.shape_cast %154 : vector<32x128xf32> to vector<1x32x128xf32>
    tpu.vector_store %arg5[%c0_145, %c0_146, %c0_147], %157 {strides = array<i32>} : memref<1x32x128xf32, #tpu.memory_space<vmem>>, vector<1x32x128xf32>,
    return
  }
  func.func @transform_0(%arg0: i32, %arg1: i32) -> (i32, i32, i32, i32) {
    %c0_i32 = arith.constant 0 : i32
    %c0_i32_0 = arith.constant 0 : i32
    %c0_i32_1 = arith.constant 0 : i32
    %c0_i32_2 = arith.constant 0 : i32
    return %arg0, %c0_i32, %c0_i32_0, %c0_i32_1 : i32, i32, i32, i32
  }
  func.func @transform_1(%arg0: i32, %arg1: i32) -> (i32, i32, i32) {
    %c0_i32 = arith.constant 0 : i32
    %c0_i32_0 = arith.constant 0 : i32
    %c0_i32_1 = arith.constant 0 : i32
    %c0_i32_2 = arith.constant 0 : i32
    return %c0_i32, %c0_i32_0, %c0_i32_1 : i32, i32, i32
  }
  func.func @transform_2(%arg0: i32, %arg1: i32) -> (i32, i32) {
    %c0_i32 = arith.constant 0 : i32
    %c0_i32_0 = arith.constant 0 : i32
    %c0_i32_1 = arith.constant 0 : i32
    return %c0_i32, %c0_i32_0 : i32, i32
  }
  func.func @transform_3(%arg0: i32, %arg1: i32) -> (i32, i32, i32) {
    %c0_i32 = arith.constant 0 : i32
    %c0_i32_0 = arith.constant 0 : i32
    return %arg0, %arg1, %c0_i32 : i32, i32, i32
  }
}

</mosaic_0001>

<llo_original>
// kernel: tpu_custom_call.1
$region0: #{tpu_custom_call.1}
  #allocation0 [shape = 'u32[]', space=smem, size = 0x4, offset = 0x4, fixed_abs, tag = 'smem constant byte address 0x4 - core index']
  #allocation1 [shape = 'u32[72,128]{1,0:T(1,128)}', space=vmem, size = 0x9000, scoped, tag = 'internal scratch']
  #allocation2 [shape = 'f32[32,8]{1,0:T(8,128)}', space=vmem, size = 0x4000, scoped, tag = 'scratch operand']
  #allocation3 [shape = 'f32[32,8]{1,0:T(8,128)}', space=vmem, size = 0x4000, scoped, tag = 'scratch operand']
  %s0 = inlined_call_operand.vmem [shape: f32[2,18,9,8], index: 0, kind: input, shape index: {}]
  %s1 = inlined_call_operand.vmem [shape: f32[6,8,128], index: 1, kind: input, shape index: {}]
  %s2 = inlined_call_operand.vmem [shape: f32[1,128], index: 2, kind: input, shape index: {}]
  %s3 = inlined_call_operand.hbm [shape: f32[2,64,128], index: 3, kind: output, shape index: {}]
  %s4 = sld [smem:[#allocation0]]
  $region45: #{tpu_custom_call.1} parent=0
    _
  %s6 = ssub.s32 1, %s4
  %s7 = scalar_select 0, %s6, %s4
  $region1: #{tpu_custom_call.1} parent=0
    #allocation4 [shape = 'u8[32768]{0}', space=vmem, size = 0x8000, scoped, tag = 'output window, operand 0']
    #allocation5 [shape = 's32[2]{0}', space=sflag, size = 0x8, scoped, tag = 'scoped memory for tpu_custom_call.1']
    %8 = vsyncpa [#allocation5], 0
    %s9 = scalar_lea.sflag [#allocation5], 1
    %10 = vsyncpa %s9, 0
    loop: start=0, step=1, limit=6
    $region2: #{tpu_custom_call.1} parent=1 // loop_pre_header
      _
    $region3: #{tpu_custom_call.1} parent=1 // loop_header
      %s12 = sphi 0, %s16
      %p13 = scmp.ge.s32.totalorder %s12, 6
      %s19 = sphi 0, %s31
      %s20 = sphi 0, %s27
      %s21 = sphi 0, %s19
      %s22 = sphi 0, %s20
      %s23 = sphi 0, %s21
      %s24 = sphi 0, %s22
      %s34 = sphi 0, %s36
      %s37 = sphi 0, %s34
      %s38 = sphi 0, %s37
      %s54 = sphi 0, %s38
      %s58 = sphi 0, %s58
      %s60 = sphi 0, %s58
      %s61 = sphi 0, %s60
      %s75 = sphi 0, %s61
      %s79 = sphi 0, %s79
      %s81 = sphi 0, %s79
      %s82 = sphi 0, %s81
      %s96 = sphi 0, %s82
      %s104 = sphi 0, %s106
      %s107 = sphi 0, %s104
      %s108 = sphi 0, %s107
      %s124 = sphi 0, %s108
    $region4: #{tpu_custom_call.1} parent=1 // loop_header_branch
      %15 = sbr.rel (%p13) target = $region8
    $region5: #{tpu_custom_call.1} parent=1 // loop_body
      %s17 = ssub.s32 %s12, 1
      %s18 = ssub.s32 %s12, 2
      %s25 = sadd.s32 1, %s20
      %p26 = scmp.ge.s32.totalorder %s25, 2
      %s27 = scalar_select %p26, 0, %s25
      %s28 = sadd.s32 1, %s19
      %s29 = scalar_select %p26, %s28, %s19
      %p30 = scmp.ge.s32.totalorder %s29, 2
      %s31 = scalar_select %p30, 0, %s29
      %s32 = ssub.s32 %s19, %s31
      %p33 = scmp.eq.s32.totalorder %s32, 0
      %s35 = sadd.s32 %s34, 1
      %s36 = scalar_select %p33, %s34, %s35
      %p39 = pneg %p33
      %p40 = scmp.eq.s32.totalorder %s12, 3
      %p41 = por %p39, %p40
      %p42 = scmp.ne.s32.totalorder %s34, %s37
      %p43 = scmp.eq.s32.totalorder %s12, 0
      %p44 = por %p42, %p43
      %p45 = scmp.ne.s32.totalorder %s34, %s37
      %p46 = scmp.eq.s32.totalorder %s17, 3
      %p47 = por %p45, %p46
      %p48 = scmp.ne.s32.totalorder %s37, %s38
      %p49 = scmp.eq.s32.totalorder %s17, 0
      %p50 = por %p48, %p49
      %p51 = scmp.ne.s32.totalorder %s37, %s38
      %p52 = scmp.eq.s32.totalorder %s18, 3
      %p53 = por %p51, %p52
      %p55 = scmp.ne.s32.totalorder %s38, %s54
      %p56 = scmp.eq.s32.totalorder %s18, 0
      %p57 = por %p55, %p56
      %s59 = sadd.s32 %s58, 1
      %p62 = scmp.eq.s32.totalorder %s12, 3
      %p63 = scmp.ne.s32.totalorder %s58, %s60
      %p64 = scmp.eq.s32.totalorder %s12, 0
      %p65 = por %p63, %p64
      %p66 = scmp.ne.s32.totalorder %s58, %s60
      %p67 = scmp.eq.s32.totalorder %s17, 3
      %p68 = por %p66, %p67
      %p69 = scmp.ne.s32.totalorder %s60, %s61
      %p70 = scmp.eq.s32.totalorder %s17, 0
      %p71 = por %p69, %p70
      %p72 = scmp.ne.s32.totalorder %s60, %s61
      %p73 = scmp.eq.s32.totalorder %s18, 3
      %p74 = por %p72, %p73
      %p76 = scmp.ne.s32.totalorder %s61, %s75
      %p77 = scmp.eq.s32.totalorder %s18, 0
      %p78 = por %p76, %p77
      %s80 = sadd.s32 %s79, 1
      %p83 = scmp.eq.s32.totalorder %s12, 3
      %p84 = scmp.ne.s32.totalorder %s79, %s81
      %p85 = scmp.eq.s32.totalorder %s12, 0
      %p86 = por %p84, %p85
      %p87 = scmp.ne.s32.totalorder %s79, %s81
      %p88 = scmp.eq.s32.totalorder %s17, 3
      %p89 = por %p87, %p88
      %p90 = scmp.ne.s32.totalorder %s81, %s82
      %p91 = scmp.eq.s32.totalorder %s17, 0
      %p92 = por %p90, %p91
      %p93 = scmp.ne.s32.totalorder %s81, %s82
      %p94 = scmp.eq.s32.totalorder %s18, 3
      %p95 = por %p93, %p94
      %p97 = scmp.ne.s32.totalorder %s82, %s96
      %p98 = scmp.eq.s32.totalorder %s18, 0
      %p99 = por %p97, %p98
      %s100 = ssub.s32 %s19, %s31
      %s101 = ssub.s32 %s20, %s27
      %s102 = sor.u32 %s100, %s101
      %p103 = scmp.eq.s32.totalorder %s102, 0
      %s105 = sadd.s32 %s104, 1
      %s106 = scalar_select %p103, %s104, %s105
      %p109 = pneg %p103
      %p110 = scmp.eq.s32.totalorder %s12, 3
      %p111 = por %p109, %p110
      %p112 = scmp.ne.s32.totalorder %s104, %s107
      %p113 = scmp.eq.s32.totalorder %s12, 0
      %p114 = por %p112, %p113
      %p115 = scmp.ne.s32.totalorder %s104, %s107
      %p116 = scmp.eq.s32.totalorder %s17, 3
      %p117 = por %p115, %p116
      %p118 = scmp.ne.s32.totalorder %s107, %s108
      %p119 = scmp.eq.s32.totalorder %s17, 0
      %p120 = por %p118, %p119
      %p121 = scmp.ne.s32.totalorder %s107, %s108
      %p122 = scmp.eq.s32.totalorder %s18, 3
      %p123 = por %p121, %p122
      %p125 = scmp.ne.s32.totalorder %s108, %s124
      %p126 = scmp.eq.s32.totalorder %s18, 0
      %p127 = por %p125, %p126
      %p128 = scmp.le.s32.totalorder 1, %s12
      %p129 = scmp.lt.s32.totalorder %s12, 5
      %p130 = pnand %p128, %p129
      %p131 = pneg %p130
      // Predicated region
      $region9: #{tpu_custom_call.1} parent=5 // pred_check
        _
      $region10: #{tpu_custom_call.1} parent=5 // pred_check_branch
        %133 = sbr.rel (%p130) target = $region12
      $region11: #{tpu_custom_call.1} parent=5 // pred_region
        %s134 = ssub.s32 %s12, 1
        // Predicated region
        $region13: #{tpu_custom_call.1} parent=11 // pred_check
          %p135 = pneg %p71
        $region14: #{tpu_custom_call.1} parent=11 // pred_check_branch
          %137 = sbr.rel (%p135) target = $region16
        $region15: #{tpu_custom_call.1} parent=11 // pred_region
          _
        $region16: #{tpu_custom_call.1} parent=11 // pred_fallthru
          _
        // Predicated region
        $region17: #{tpu_custom_call.1} parent=11 // pred_check
          %p138 = pneg %p92
        $region18: #{tpu_custom_call.1} parent=11 // pred_check_branch
          %140 = sbr.rel (%p138) target = $region20
        $region19: #{tpu_custom_call.1} parent=11 // pred_region
          _
        $region20: #{tpu_custom_call.1} parent=11 // pred_fallthru
          _
      $region12: #{tpu_custom_call.1} parent=5 // pred_fallthru
        _
      %p141 = scmp.lt.s32.totalorder %s12, 4
      // Predicated region
      $region21: #{tpu_custom_call.1} parent=5 // pred_check
        %p142 = pneg %p141
      $region22: #{tpu_custom_call.1} parent=5 // pred_check_branch
        %144 = sbr.rel (%p142) target = $region24
      $region23: #{tpu_custom_call.1} parent=5 // pred_region
        // Predicated region
        $region25: #{tpu_custom_call.1} parent=23 // pred_check
          %p145 = pneg %p44
        $region26: #{tpu_custom_call.1} parent=23 // pred_check_branch
          %147 = sbr.rel (%p145) target = $region28
        $region27: #{tpu_custom_call.1} parent=23 // pred_region
          %p148 = scmp.lt.s32.totalorder %s19, 1
          %s149 = scalar_select %p148, %s19, 1
          %s150 = smul.addr %s149, 36
          %s151 = smul.addr %s150, 8
          %s152 = scalar_lea.vmem %s0, %s151
        $region28: #{tpu_custom_call.1} parent=23 // pred_fallthru
          _
      $region24: #{tpu_custom_call.1} parent=5 // pred_fallthru
        _
      %p153 = scmp.le.s32.totalorder 1, %s12
      %p154 = scmp.lt.s32.totalorder %s12, 5
      %p155 = pnand %p153, %p154
      %p156 = pneg %p155
      // Predicated region
      $region29: #{tpu_custom_call.1} parent=5 // pred_check
        _
      $region30: #{tpu_custom_call.1} parent=5 // pred_check_branch
        %158 = sbr.rel (%p155) target = $region32
      $region31: #{tpu_custom_call.1} parent=5 // pred_region
        %s159 = ssub.s32 %s12, 1
        %p160 = scmp.lt.s32.totalorder %s21, 1
        %s161 = scalar_select %p160, %s21, 1
        %s162 = smul.addr %s161, 36
        %s163 = smul.addr %s162, 8
        %s164 = scalar_lea.vmem %s0, %s163
        %p165 = pneg %p50
        %p166 = pneg %p47
        %p167 = pneg %p71
        %p168 = pneg %p68
        %p169 = pneg %p92
        %p170 = pneg %p89
        %p171 = pneg %p120
        %p172 = pneg %p117
        %s173 = sand.u32 %s107, 1
        %s174 = scalar_lea.sflag [#allocation5], %s173
        %s175 = sand.u32 %s107, 1
        %s176 = smul.addr %s175, 32
        %s177 = scalar_lea.vmem [#allocation4], %s176
        %p178 = scmp.lt.s32.totalorder %s21, 1
        %s179 = scalar_select %p178, %s21, 1
        %s180 = smul.addr %s179, 36
        %s181 = smul.addr %s180, 8
        %s182 = scalar_lea.vmem %s0, %s181
        %s183 = smul.u32 4, %s22
        %s184 = smul.u32 %s22, 4
        %s185 = smul.u32 %s22, 8
        %s186 = smul.u32 %s185, 16
        %s187 = scalar_lea.vmem %s182, %s186
        %v188 = vld [vmem:[%s187] sm:$0xff]
        %v189 = vld [vmem:[%s187 + $0x8] sm:$0x1]
        %vm190 = vcmask 64512
        %191 = vst.msk [vmem:[#allocation2] sm:$0xff] %vm190, %v188
        %vm192 = vcmask 64513
        %193 = vst.msk [vmem:[#allocation3 - $0x1] sm:$0xfe] %vm192, %v188
        %vm194 = vcmask 57344
        %195 = vst.msk [vmem:[#allocation3 + $0x7] sm:$0x1] %vm194, %v189
        %s196 = sadd.s32 %s184, 1
        %s197 = smul.u32 %s196, 2
        %s198 = smul.u32 %s197, 16
        %s199 = scalar_lea.vmem %s182, %s198
        %v200 = vld [vmem:[%s199] sm:$0xff]
        %v201 = vld [vmem:[%s199 + $0x8] sm:$0x1]
        %202 = vst.msk [vmem:[#allocation2 + $0x8] sm:$0xff] %vm190, %v200
        %203 = vst.msk [vmem:[#allocation3 + $0x7] sm:$0xfe] %vm192, %v200
        %204 = vst.msk [vmem:[#allocation3 + $0xf] sm:$0x1] %vm194, %v201
        %s205 = sadd.s32 %s184, 2
        %s206 = smul.u32 %s205, 2
        %s207 = smul.u32 %s206, 16
        %s208 = scalar_lea.vmem %s182, %s207
        %v209 = vld [vmem:[%s208] sm:$0xff]
        %v210 = vld [vmem:[%s208 + $0x8] sm:$0x1]
        %211 = vst.msk [vmem:[#allocation2 + $0x10] sm:$0xff] %vm190, %v209
        %212 = vst.msk [vmem:[#allocation3 + $0xf] sm:$0xfe] %vm192, %v209
        %213 = vst.msk [vmem:[#allocation3 + $0x17] sm:$0x1] %vm194, %v210
        %s214 = sadd.s32 %s184, 3
        %s215 = smul.u32 %s214, 2
        %s216 = smul.u32 %s215, 16
        %s217 = scalar_lea.vmem %s182, %s216
        %v218 = vld [vmem:[%s217] sm:$0xff]
        %v219 = vld [vmem:[%s217 + $0x8] sm:$0x1]
        %220 = vst.msk [vmem:[#allocation2 + $0x18] sm:$0xff] %vm190, %v218
        %221 = vst.msk [vmem:[#allocation3 + $0x17] sm:$0xfe] %vm192, %v218
        %222 = vst.msk [vmem:[#allocation3 + $0x1f] sm:$0x1] %vm194, %v219
        %v223 = vld [vmem:[#allocation2] sm:$0xff]
        %v224 = vld [vmem:[#allocation2 + $0x8] sm:$0xff]
        %v225 = vld [vmem:[#allocation2 + $0x10] sm:$0xff]
        %v226 = vld [vmem:[#allocation2 + $0x18] sm:$0xff]
        %v227 = vld [vmem:[%s1] sm:$0xff]
        %v228 = vld [vmem:[#allocation3] sm:$0xff]
        %v229 = vld [vmem:[#allocation3 + $0x8] sm:$0xff]
        %v230 = vld [vmem:[#allocation3 + $0x10] sm:$0xff]
        %v231 = vld [vmem:[#allocation3 + $0x18] sm:$0xff]
        %s232 = scalar_lea.vmem %s1, 8
        %v233 = vld [vmem:[%s232] sm:$0xff]
        %v235 = vsel %vm190, %v228, 0
        %v238 = vsel %vm190, %v229, 0
        %v241 = vsel %vm190, %v230, 0
        %v244 = vsel %vm190, %v231, 0
        %246 = vmatpush.msra.mxu0 0.0
        %247 = vmatpush.msra.mxu0 0.0
        %248 = vmatpush.msra.mxu0 0.0
        %249 = vmatpush.msra.mxu0 0.0
        %250 = vmatpush.msra.mxu0 0.0
        %251 = vmatpush.msra.mxu0 0.0
        %252 = vmatpush.msra.mxu0 0.0
        %253 = vmatpush.msra.mxu0 0.0
        %254 = vmatpush.msra.mxu0 0.0
        %255 = vmatpush.msra.mxu0 0.0
        %256 = vmatpush.msra.mxu0 0.0
        %257 = vmatpush.msra.mxu0 0.0
        %258 = vmatpush.msra.mxu0 0.0
        %259 = vmatpush.msra.mxu0 0.0
        %260 = vmatpush.msra.mxu0 0.0
        %261 = vmatpush.msra.mxu0 %v233
        %262 = vmatmul.f32.gmra.mxu0 %v235
        %v263 = vpop.f32.mrf.mxu0
        %v264 = vadd.f32 0.0, %v263
        %265 = vmatmul.f32.gmra.mxu0 %v238
        %v266 = vpop.f32.mrf.mxu0
        %v267 = vadd.f32 0.0, %v266
        %268 = vmatmul.f32.gmra.mxu0 %v241
        %v269 = vpop.f32.mrf.mxu0
        %v270 = vadd.f32 0.0, %v269
        %271 = vmatmul.f32.gmra.mxu0 %v244
        %v272 = vpop.f32.mrf.mxu0
        %v273 = vadd.f32 0.0, %v272
        %274 = vdwg.mxu0
        %v276 = vsel %vm190, %v223, 0
        %v279 = vsel %vm190, %v224, 0
        %v282 = vsel %vm190, %v225, 0
        %v285 = vsel %vm190, %v226, 0
        %287 = vmatpush.msra.mxu0 0.0
        %288 = vmatpush.msra.mxu0 0.0
        %289 = vmatpush.msra.mxu0 0.0
        %290 = vmatpush.msra.mxu0 0.0
        %291 = vmatpush.msra.mxu0 0.0
        %292 = vmatpush.msra.mxu0 0.0
        %293 = vmatpush.msra.mxu0 0.0
        %294 = vmatpush.msra.mxu0 0.0
        %295 = vmatpush.msra.mxu0 0.0
        %296 = vmatpush.msra.mxu0 0.0
        %297 = vmatpush.msra.mxu0 0.0
        %298 = vmatpush.msra.mxu0 0.0
        %299 = vmatpush.msra.mxu0 0.0
        %300 = vmatpush.msra.mxu0 0.0
        %301 = vmatpush.msra.mxu0 0.0
        %302 = vmatpush.msra.mxu0 %v227
        %303 = vmatmul.f32.gmra.mxu0 %v276
        %v304 = vpop.f32.mrf.mxu0
        %v305 = vadd.f32 %v264, %v304
        %306 = vmatmul.f32.gmra.mxu0 %v279
        %v307 = vpop.f32.mrf.mxu0
        %v308 = vadd.f32 %v267, %v307
        %309 = vmatmul.f32.gmra.mxu0 %v282
        %v310 = vpop.f32.mrf.mxu0
        %v311 = vadd.f32 %v270, %v310
        %312 = vmatmul.f32.gmra.mxu0 %v285
        %v313 = vpop.f32.mrf.mxu0
        %v314 = vadd.f32 %v273, %v313
        %315 = vdwg.mxu0
        %s316 = sadd.s32 %s185, 1
        %s317 = smul.u32 %s316, 16
        %s318 = scalar_lea.vmem %s182, %s317
        %v319 = vld [vmem:[%s318] sm:$0xff]
        %v320 = vld [vmem:[%s318 + $0x8] sm:$0x1]
        %321 = vst.msk [vmem:[#allocation2] sm:$0xff] %vm190, %v319
        %322 = vst.msk [vmem:[#allocation3 - $0x1] sm:$0xfe] %vm192, %v319
        %323 = vst.msk [vmem:[#allocation3 + $0x7] sm:$0x1] %vm194, %v320
        %s324 = sadd.s32 %s197, 1
        %s325 = smul.u32 %s324, 16
        %s326 = scalar_lea.vmem %s182, %s325
        %v327 = vld [vmem:[%s326] sm:$0xff]
        %v328 = vld [vmem:[%s326 + $0x8] sm:$0x1]
        %329 = vst.msk [vmem:[#allocation2 + $0x8] sm:$0xff] %vm190, %v327
        %330 = vst.msk [vmem:[#allocation3 + $0x7] sm:$0xfe] %vm192, %v327
        %331 = vst.msk [vmem:[#allocation3 + $0xf] sm:$0x1] %vm194, %v328
        %s332 = sadd.s32 %s206, 1
        %s333 = smul.u32 %s332, 16
        %s334 = scalar_lea.vmem %s182, %s333
        %v335 = vld [vmem:[%s334] sm:$0xff]
        %v336 = vld [vmem:[%s334 + $0x8] sm:$0x1]
        %337 = vst.msk [vmem:[#allocation2 + $0x10] sm:$0xff] %vm190, %v335
        %338 = vst.msk [vmem:[#allocation3 + $0xf] sm:$0xfe] %vm192, %v335
        %339 = vst.msk [vmem:[#allocation3 + $0x17] sm:$0x1] %vm194, %v336
        %s340 = sadd.s32 %s215, 1
        %s341 = smul.u32 %s340, 16
        %s342 = scalar_lea.vmem %s182, %s341
        %v343 = vld [vmem:[%s342] sm:$0xff]
        %v344 = vld [vmem:[%s342 + $0x8] sm:$0x1]
        %345 = vst.msk [vmem:[#allocation2 + $0x18] sm:$0xff] %vm190, %v343
        %346 = vst.msk [vmem:[#allocation3 + $0x17] sm:$0xfe] %vm192, %v343
        %347 = vst.msk [vmem:[#allocation3 + $0x1f] sm:$0x1] %vm194, %v344
        %v348 = vld [vmem:[#allocation2] sm:$0xff]
        %v349 = vld [vmem:[#allocation2 + $0x8] sm:$0xff]
        %v350 = vld [vmem:[#allocation2 + $0x10] sm:$0xff]
        %v351 = vld [vmem:[#allocation2 + $0x18] sm:$0xff]
        %s352 = scalar_lea.vmem %s1, 16
        %v353 = vld [vmem:[%s352] sm:$0xff]
        %v355 = vsel %vm190, %v348, 0
        %v358 = vsel %vm190, %v349, 0
        %v361 = vsel %vm190, %v350, 0
        %v364 = vsel %vm190, %v351, 0
        %366 = vmatpush.msra.mxu0 0.0
        %367 = vmatpush.msra.mxu0 0.0
        %368 = vmatpush.msra.mxu0 0.0
        %369 = vmatpush.msra.mxu0 0.0
        %370 = vmatpush.msra.mxu0 0.0
        %371 = vmatpush.msra.mxu0 0.0
        %372 = vmatpush.msra.mxu0 0.0
        %373 = vmatpush.msra.mxu0 0.0
        %374 = vmatpush.msra.mxu0 0.0
        %375 = vmatpush.msra.mxu0 0.0
        %376 = vmatpush.msra.mxu0 0.0
        %377 = vmatpush.msra.mxu0 0.0
        %378 = vmatpush.msra.mxu0 0.0
        %379 = vmatpush.msra.mxu0 0.0
        %380 = vmatpush.msra.mxu0 0.0
        %381 = vmatpush.msra.mxu0 %v353
        %382 = vmatmul.f32.gmra.mxu0 %v355
        %v383 = vpop.f32.mrf.mxu0
        %v384 = vadd.f32 0.0, %v383
        %385 = vmatmul.f32.gmra.mxu0 %v358
        %v386 = vpop.f32.mrf.mxu0
        %v387 = vadd.f32 0.0, %v386
        %388 = vmatmul.f32.gmra.mxu0 %v361
        %v389 = vpop.f32.mrf.mxu0
        %v390 = vadd.f32 0.0, %v389
        %391 = vmatmul.f32.gmra.mxu0 %v364
        %v392 = vpop.f32.mrf.mxu0
        %v393 = vadd.f32 0.0, %v392
        %394 = vdwg.mxu0
        %v395 = vadd.f32 %v305, %v384
        %v396 = vadd.f32 %v308, %v387
        %v397 = vadd.f32 %v311, %v390
        %v398 = vadd.f32 %v314, %v393
        %v399 = vld [vmem:[#allocation3] sm:$0xff]
        %v400 = vld [vmem:[#allocation3 + $0x8] sm:$0xff]
        %v401 = vld [vmem:[#allocation3 + $0x10] sm:$0xff]
        %v402 = vld [vmem:[#allocation3 + $0x18] sm:$0xff]
        %s403 = scalar_lea.vmem %s1, 24
        %v404 = vld [vmem:[%s403] sm:$0xff]
        %v406 = vsel %vm190, %v399, 0
        %v409 = vsel %vm190, %v400, 0
        %v412 = vsel %vm190, %v401, 0
        %v415 = vsel %vm190, %v402, 0
        %417 = vmatpush.msra.mxu0 0.0
        %418 = vmatpush.msra.mxu0 0.0
        %419 = vmatpush.msra.mxu0 0.0
        %420 = vmatpush.msra.mxu0 0.0
        %421 = vmatpush.msra.mxu0 0.0
        %422 = vmatpush.msra.mxu0 0.0
        %423 = vmatpush.msra.mxu0 0.0
        %424 = vmatpush.msra.mxu0 0.0
        %425 = vmatpush.msra.mxu0 0.0
        %426 = vmatpush.msra.mxu0 0.0
        %427 = vmatpush.msra.mxu0 0.0
        %428 = vmatpush.msra.mxu0 0.0
        %429 = vmatpush.msra.mxu0 0.0
        %430 = vmatpush.msra.mxu0 0.0
        %431 = vmatpush.msra.mxu0 0.0
        %432 = vmatpush.msra.mxu0 %v404
        %433 = vmatmul.f32.gmra.mxu0 %v406
        %v434 = vpop.f32.mrf.mxu0
        %v435 = vadd.f32 0.0, %v434
        %436 = vmatmul.f32.gmra.mxu0 %v409
        %v437 = vpop.f32.mrf.mxu0
        %v438 = vadd.f32 0.0, %v437
        %439 = vmatmul.f32.gmra.mxu0 %v412
        %v440 = vpop.f32.mrf.mxu0
        %v441 = vadd.f32 0.0, %v440
        %442 = vmatmul.f32.gmra.mxu0 %v415
        %v443 = vpop.f32.mrf.mxu0
        %v444 = vadd.f32 0.0, %v443
        %445 = vdwg.mxu0
        %v446 = vadd.f32 %v395, %v435
        %v447 = vadd.f32 %v396, %v438
        %v448 = vadd.f32 %v397, %v441
        %v449 = vadd.f32 %v398, %v444
        %s450 = sadd.s32 %s185, 2
        %s451 = smul.u32 %s450, 16
        %s452 = scalar_lea.vmem %s182, %s451
        %v453 = vld [vmem:[%s452] sm:$0xff]
        %v454 = vld [vmem:[%s452 + $0x8] sm:$0x1]
        %455 = vst.msk [vmem:[#allocation2] sm:$0xff] %vm190, %v453
        %456 = vst.msk [vmem:[#allocation3 - $0x1] sm:$0xfe] %vm192, %v453
        %457 = vst.msk [vmem:[#allocation3 + $0x7] sm:$0x1] %vm194, %v454
        %s458 = sadd.s32 %s197, 2
        %s459 = smul.u32 %s458, 16
        %s460 = scalar_lea.vmem %s182, %s459
        %v461 = vld [vmem:[%s460] sm:$0xff]
        %v462 = vld [vmem:[%s460 + $0x8] sm:$0x1]
        %463 = vst.msk [vmem:[#allocation2 + $0x8] sm:$0xff] %vm190, %v461
        %464 = vst.msk [vmem:[#allocation3 + $0x7] sm:$0xfe] %vm192, %v461
        %465 = vst.msk [vmem:[#allocation3 + $0xf] sm:$0x1] %vm194, %v462
        %s466 = sadd.s32 %s206, 2
        %s467 = smul.u32 %s466, 16
        %s468 = scalar_lea.vmem %s182, %s467
        %v469 = vld [vmem:[%s468] sm:$0xff]
        %v470 = vld [vmem:[%s468 + $0x8] sm:$0x1]
        %471 = vst.msk [vmem:[#allocation2 + $0x10] sm:$0xff] %vm190, %v469
        %472 = vst.msk [vmem:[#allocation3 + $0xf] sm:$0xfe] %vm192, %v469
        %473 = vst.msk [vmem:[#allocation3 + $0x17] sm:$0x1] %vm194, %v470
        %s474 = sadd.s32 %s215, 2
        %s475 = smul.u32 %s474, 16
        %s476 = scalar_lea.vmem %s182, %s475
        %v477 = vld [vmem:[%s476] sm:$0xff]
        %v478 = vld [vmem:[%s476 + $0x8] sm:$0x1]
        %479 = vst.msk [vmem:[#allocation2 + $0x18] sm:$0xff] %vm190, %v477
        %480 = vst.msk [vmem:[#allocation3 + $0x17] sm:$0xfe] %vm192, %v477
        %481 = vst.msk [vmem:[#allocation3 + $0x1f] sm:$0x1] %vm194, %v478
        %v482 = vld [vmem:[#allocation2] sm:$0xff]
        %v483 = vld [vmem:[#allocation2 + $0x8] sm:$0xff]
        %v484 = vld [vmem:[#allocation2 + $0x10] sm:$0xff]
        %v485 = vld [vmem:[#allocation2 + $0x18] sm:$0xff]
        %s486 = scalar_lea.vmem %s1, 32
        %v487 = vld [vmem:[%s486] sm:$0xff]
        %v489 = vsel %vm190, %v482, 0
        %v492 = vsel %vm190, %v483, 0
        %v495 = vsel %vm190, %v484, 0
        %v498 = vsel %vm190, %v485, 0
        %500 = vmatpush.msra.mxu0 0.0
        %501 = vmatpush.msra.mxu0 0.0
        %502 = vmatpush.msra.mxu0 0.0
        %503 = vmatpush.msra.mxu0 0.0
        %504 = vmatpush.msra.mxu0 0.0
        %505 = vmatpush.msra.mxu0 0.0
        %506 = vmatpush.msra.mxu0 0.0
        %507 = vmatpush.msra.mxu0 0.0
        %508 = vmatpush.msra.mxu0 0.0
        %509 = vmatpush.msra.mxu0 0.0
        %510 = vmatpush.msra.mxu0 0.0
        %511 = vmatpush.msra.mxu0 0.0
        %512 = vmatpush.msra.mxu0 0.0
        %513 = vmatpush.msra.mxu0 0.0
        %514 = vmatpush.msra.mxu0 0.0
        %515 = vmatpush.msra.mxu0 %v487
        %516 = vmatmul.f32.gmra.mxu0 %v489
        %v517 = vpop.f32.mrf.mxu0
        %v518 = vadd.f32 0.0, %v517
        %519 = vmatmul.f32.gmra.mxu0 %v492
        %v520 = vpop.f32.mrf.mxu0
        %v521 = vadd.f32 0.0, %v520
        %522 = vmatmul.f32.gmra.mxu0 %v495
        %v523 = vpop.f32.mrf.mxu0
        %v524 = vadd.f32 0.0, %v523
        %525 = vmatmul.f32.gmra.mxu0 %v498
        %v526 = vpop.f32.mrf.mxu0
        %v527 = vadd.f32 0.0, %v526
        %528 = vdwg.mxu0
        %v529 = vadd.f32 %v446, %v518
        %v530 = vadd.f32 %v447, %v521
        %v531 = vadd.f32 %v448, %v524
        %v532 = vadd.f32 %v449, %v527
        %v533 = vld [vmem:[#allocation3] sm:$0xff]
        %v534 = vld [vmem:[#allocation3 + $0x8] sm:$0xff]
        %v535 = vld [vmem:[#allocation3 + $0x10] sm:$0xff]
        %v536 = vld [vmem:[#allocation3 + $0x18] sm:$0xff]
        %s537 = scalar_lea.vmem %s1, 40
        %v538 = vld [vmem:[%s537] sm:$0xff]
        %v540 = vsel %vm190, %v533, 0
        %v543 = vsel %vm190, %v534, 0
        %v546 = vsel %vm190, %v535, 0
        %v549 = vsel %vm190, %v536, 0
        %551 = vmatpush.msra.mxu0 0.0
        %552 = vmatpush.msra.mxu0 0.0
        %553 = vmatpush.msra.mxu0 0.0
        %554 = vmatpush.msra.mxu0 0.0
        %555 = vmatpush.msra.mxu0 0.0
        %556 = vmatpush.msra.mxu0 0.0
        %557 = vmatpush.msra.mxu0 0.0
        %558 = vmatpush.msra.mxu0 0.0
        %559 = vmatpush.msra.mxu0 0.0
        %560 = vmatpush.msra.mxu0 0.0
        %561 = vmatpush.msra.mxu0 0.0
        %562 = vmatpush.msra.mxu0 0.0
        %563 = vmatpush.msra.mxu0 0.0
        %564 = vmatpush.msra.mxu0 0.0
        %565 = vmatpush.msra.mxu0 0.0
        %566 = vmatpush.msra.mxu0 %v538
        %567 = vmatmul.f32.gmra.mxu0 %v540
        %v568 = vpop.f32.mrf.mxu0
        %v569 = vadd.f32 0.0, %v568
        %570 = vmatmul.f32.gmra.mxu0 %v543
        %v571 = vpop.f32.mrf.mxu0
        %v572 = vadd.f32 0.0, %v571
        %573 = vmatmul.f32.gmra.mxu0 %v546
        %v574 = vpop.f32.mrf.mxu0
        %v575 = vadd.f32 0.0, %v574
        %576 = vmatmul.f32.gmra.mxu0 %v549
        %v577 = vpop.f32.mrf.mxu0
        %v578 = vadd.f32 0.0, %v577
        %579 = vdwg.mxu0
        %v580 = vadd.f32 %v529, %v569
        %v581 = vadd.f32 %v530, %v572
        %v582 = vadd.f32 %v531, %v575
        %v583 = vadd.f32 %v532, %v578
        %v584 = vld [vmem:[%s2] sm:$0x1]
        %v586 = vperm.slane %v584, 0
        %v588 = vadd.f32 %v580, %v586
        %v589 = vadd.f32 %v581, %v586
        %v590 = vadd.f32 %v582, %v586
        %v591 = vadd.f32 %v583, %v586
        %592 = vst [vmem:[%s177] sm:$0xff] %v588
        %593 = vst [vmem:[%s177 + $0x8] sm:$0xff] %v589
        %594 = vst [vmem:[%s177 + $0x10] sm:$0xff] %v590
        %595 = vst [vmem:[%s177 + $0x18] sm:$0xff] %v591
        %s596 = sand.u32 %s107, 1
        %s597 = scalar_lea.sflag [#allocation5], %s596
        %s598 = sand.u32 %s107, 1
        %s599 = smul.addr %s598, 32
        %s600 = scalar_lea.vmem [#allocation4], %s599
        // Predicated region
        $region33: #{tpu_custom_call.1} parent=31 // pred_check
          %p601 = pneg %p117
        $region34: #{tpu_custom_call.1} parent=31 // pred_check_branch
          %603 = sbr.rel (%p601) target = $region36
        $region35: #{tpu_custom_call.1} parent=31 // pred_region
          %s604 = smul.u32 4, %s22
          %606 = vsyncadd %s597, 0
          %s607 = smul.addr %s21, 8
          %s608 = sadd.s32 %s604, %s607
          %s609 = smul.addr %s608, 8
          %s610 = scalar_lea.hbm %s3, %s609
          %s611 = sshll.u32 %s600, 4
          %s612 = int_to_ptr.vmem [resolvable:$true] %s611
          %s613 = sshll.u32 %s610, 4
          %s614 = int_to_ptr.hbm [resolvable:$true] %s613
          %619 = dma.vmem_to_hbm [thread:$0]  %s612, 512, %s614, %s597, 128, 128, 8
        $region36: #{tpu_custom_call.1} parent=31 // pred_fallthru
          _
      $region32: #{tpu_custom_call.1} parent=5 // pred_fallthru
        _
      %p620 = scmp.le.s32.totalorder 2, %s12
      // Predicated region
      $region37: #{tpu_custom_call.1} parent=5 // pred_check
        %p621 = pneg %p620
      $region38: #{tpu_custom_call.1} parent=5 // pred_check_branch
        %623 = sbr.rel (%p621) target = $region40
      $region39: #{tpu_custom_call.1} parent=5 // pred_region
        %s624 = ssub.s32 %s12, 2
        // Predicated region
        $region41: #{tpu_custom_call.1} parent=39 // pred_check
          %p625 = pneg %p123
        $region42: #{tpu_custom_call.1} parent=39 // pred_check_branch
          %627 = sbr.rel (%p625) target = $region44
        $region43: #{tpu_custom_call.1} parent=39 // pred_region
          %s628 = sand.u32 %s108, 1
          %s629 = scalar_lea.sflag [#allocation5], %s628
          %s630 = sand.u32 %s108, 1
          %s631 = smul.addr %s630, 32
          %s632 = scalar_lea.vmem [#allocation4], %s631
          %634 = dma.done %s629, 512
        $region44: #{tpu_custom_call.1} parent=39 // pred_fallthru
          _
      $region40: #{tpu_custom_call.1} parent=5 // pred_fallthru
        _
    $region6: #{tpu_custom_call.1} parent=1 // loop_footer
      %s16 = sadd.s32 1, %s12
    $region7: #{tpu_custom_call.1} parent=1 // loop_footer_branch
      %11 = sbr.rel target = $region3
    $region8: #{tpu_custom_call.1} parent=1 // loop_exit
      _
    %635 = vsyncpa [#allocation5], 1
    %s636 = scalar_lea.sflag [#allocation5], 1
    %637 = vsyncpa %s636, 1

</llo_original>
